<compile_context>
chip_gen: v7x
topology: tpu7x:2x2x1
jax: 0.10.0
libtpu: 0.0.40
codegen_flags: <defaults>
</compile_context>

<pallas_src>
import math

import jax
import jax.numpy as jnp
from jax.experimental import pallas as pl
from jax.experimental.pallas import tpu as pltpu


def _scale_mul_kernel(scale_ref, x_ref, o_ref):
    # scale_ref: (1, lane) f32 block, broadcasts over the sublane (row) axis.
    # x_ref / o_ref: (tile_rows, lane) blocks in the input/output dtype.
    o_ref[...] = (x_ref[...] * scale_ref[...]).astype(o_ref.dtype)


def _round_up(a, b):
    return ((a + b - 1) // b) * b


def learnable_size_scaling(x, num_nodes, scale, raw_param,
                           min_power, max_power=None, set_id=False,
                           target_block_bytes=6 * 1024 * 1024):
    """Forward pass of LearnableSizeScaling.

    x:          [..., F] (f32 or bf16)
    num_nodes:  python/JAX scalar (> 0)
    scale:      [F]
    raw_param:  scalar (raw parameter of RangeConstrainedParameter)
    """
    if set_id:
        return x  # identity branch

    if max_power is None:
        max_power = min_power
    if min_power is None:
        min_power = max_power
    assert not (min_power is None or max_power is None)

    orig_shape = x.shape
    F = orig_shape[-1]
    dtype = x.dtype
    itemsize = jnp.dtype(dtype).itemsize

    x2d = x.reshape(-1, F)                 # free for contiguous row-major x
    N = x2d.shape[0]

    # ---- grid-invariant scalar math, hoisted out of the kernel -------------
    raw = jnp.asarray(raw_param, jnp.float32).reshape(())
    power = min_power + (max_power - min_power) * jax.nn.sigmoid(raw)
    # NOTE: num_nodes must be > 0 (true for real node counts); <= 0 gives NaN.
    factor = jnp.power(jnp.asarray(num_nodes, jnp.float32), power)
    # Keep scale in f32: multiply in f32 inside the kernel and cast the
    # product to the output dtype (single rounding for bf16 inputs).
    scale_eff = scale.astype(jnp.float32) * factor                       # [F]

    # ---- lane-dense layout: widen the lane dim to lcm(F, 128) when free ----
    L = (F * 128) // math.gcd(F, 128)
    rep = L // F
    if L != F and L <= 512 and N % rep == 0:
        lane = L
        rows = (N * F) // L
        scale_vec = jnp.tile(scale_eff, rep)                             # [L]
        x_work = x2d.reshape(rows, lane)   # free bitcast (no pad needed)
    else:
        lane = F
        rows = N
        scale_vec = scale_eff
        x_work = x2d

    # ---- tile size: ~target_block_bytes per x block, dtype-aligned rows ----
    sublane = max(8, 32 // itemsize)       # f32: 8, bf16: 16, int8/fp8: 32
    max_rows = max(1, target_block_bytes // (lane * itemsize))
    tile_rows = max(sublane, (max_rows // sublane) * sublane)
    tile_rows = min(tile_rows, _round_up(rows, sublane))
    grid = (pl.cdiv(rows, tile_rows),)     # ragged last block handled by Pallas

    out2 = pl.pallas_call(
        _scale_mul_kernel,
        out_shape=jax.ShapeDtypeStruct((rows, lane), dtype),
        grid_spec=pl.GridSpec(
            grid=grid,
            in_specs=[
                pl.BlockSpec((1, lane), lambda i: (0, 0)),               # scale
                pl.BlockSpec((tile_rows, lane), lambda i: (i, 0)),       # x
            ],
            out_specs=pl.BlockSpec((tile_rows, lane), lambda i: (i, 0)),
        ),
        compiler_params=pltpu.CompilerParams(
            dimension_semantics=("parallel",),
            vmem_limit_bytes=48 * 1024 * 1024,
        ),
        cost_estimate=pl.CostEstimate(
            flops=rows * lane,
            transcendentals=0,
            bytes_accessed=2 * rows * lane * itemsize + lane * 4,
        ),
    )(scale_vec.reshape(1, lane), x_work)

    # Free bitcast back to the original shape (rows * lane == prod(orig_shape)).
    return out2.reshape(orig_shape)


def _reference(x, num_nodes, scale, raw_param, min_power, max_power):
    power = min_power + (max_power - min_power) * jax.nn.sigmoid(
        jnp.asarray(raw_param, jnp.float32))
    return (scale.astype(jnp.float32) * x.astype(jnp.float32)
            * (jnp.float32(num_nodes) ** power))


if __name__ == "__main__":
    key = jax.random.PRNGKey(0)
    k_x, k_raw, k_x2, k_x3 = jax.random.split(key, 4)

    min_power, max_power = 0.25, 1.5
    raw_param = jax.random.normal(k_raw, ()).astype(jnp.float32)

    # --- case 1: F < 128, lane-dense repack path (lcm = 128), f32 ----------
    N, F = 16, 32
    num_nodes = 8.0
    x = jax.random.normal(k_x, (N, F), dtype=jnp.float32)
    scale = jnp.ones((F,), dtype=jnp.float32)
    out = learnable_size_scaling(
        x, num_nodes, scale, raw_param, min_power, max_power, set_id=False)
    out = jax.block_until_ready(out)
    ref = _reference(x, num_nodes, scale, raw_param, min_power, max_power)
    assert out.shape == x.shape and out.dtype == x.dtype
    assert jnp.allclose(out, ref, rtol=1e-5, atol=1e-5), "mismatch (f32, F=32)"

    # --- case 2: F >= 128, N not a multiple of 8 (ragged grid, no pad) -----
    N2, F2 = 24, 256
    x2 = jax.random.normal(k_x2, (N2, F2), dtype=jnp.float32)
    scale2 = jnp.linspace(0.5, 1.5, F2, dtype=jnp.float32)
    out2 = learnable_size_scaling(
        x2, 5.0, scale2, raw_param, min_power, max_power)
    out2 = jax.block_until_ready(out2)
    ref2 = _reference(x2, 5.0, scale2, raw_param, min_power, max_power)
    assert out2.shape == x2.shape
    assert jnp.allclose(out2, ref2, rtol=1e-5, atol=1e-5), "mismatch (f32, F=256)"

    # --- case 3: repack not free (N % rep != 0) -> lane=F fallback ---------
    N3, F3 = 5, 32
    x3 = jax.random.normal(k_x3, (N3, F3), dtype=jnp.float32)
    scale3 = jnp.linspace(0.9, 1.1, F3, dtype=jnp.float32)
    out3 = learnable_size_scaling(
        x3, 3.0, scale3, raw_param, min_power, max_power)
    out3 = jax.block_until_ready(out3)
    ref3 = _reference(x3, 3.0, scale3, raw_param, min_power, max_power)
    assert out3.shape == x3.shape
    assert jnp.allclose(out3, ref3, rtol=1e-5, atol=1e-5), "mismatch (fallback)"

    # --- case 4: bf16 input stays bf16, f32 scale inside the kernel --------
    xb = x.astype(jnp.bfloat16)
    outb = learnable_size_scaling(
        xb, num_nodes, scale, raw_param, min_power, max_power)
    outb = jax.block_until_ready(outb)
    assert outb.dtype == jnp.bfloat16
    refb = _reference(xb, num_nodes, scale, raw_param, min_power, max_power)
    assert jnp.allclose(outb.astype(jnp.float32), refb, rtol=2e-2, atol=2e-2), \
        "mismatch (bf16)"

    # --- case 5: 3-D input (leading dims flattened, free reshape) ----------
    x4 = jax.random.normal(k_x, (2, 8, 32), dtype=jnp.float32)
    out4 = learnable_size_scaling(
        x4, 7.0, scale, raw_param, min_power, max_power)
    out4 = jax.block_until_ready(out4)
    ref4 = _reference(x4, 7.0, scale, raw_param, min_power, max_power)
    assert out4.shape == x4.shape
    assert jnp.allclose(out4, ref4, rtol=1e-5, atol=1e-5), "mismatch (3-D)"

    # --- set_id=True branch is a plain identity ------------------------------
    out_id = learnable_size_scaling(
        x, num_nodes, scale, raw_param, min_power, max_power, set_id=True)
    assert jnp.array_equal(out_id, x)

    print("KERNEL_OK")
</pallas_src>

<mosaic_0001>
module attributes {stable_mosaic.version = 11 : i64} {
  func.func @_scale_mul_kernel(%arg0: i32, %arg1: memref<1x128xf32, #tpu.memory_space<vmem>>, %arg2: memref<8x128xf32, #tpu.memory_space<vmem>>, %arg3: memref<8x128xf32, #tpu.memory_space<vmem>>) attributes {dimension_semantics = [#tpu.dimension_semantics<parallel>], iteration_bounds = array<i64: 1>, scalar_prefetch = 0 : i64, scratch_operands = 0 : i64, tpu.core_type = #tpu.core_type<tc>, window_params = [{pipeline_mode = #tpu.pipeline_mode<synchronous>, transform_indices = @transform_0, window_bounds = array<i64: 1, 128>}, {transform_indices = @transform_1, window_bounds = array<i64: 8, 128>}, {transform_indices = @transform_2, window_bounds = array<i64: 8, 128>}]} {
    %c0 = arith.constant 0 : index
    %c0_0 = arith.constant 0 : index
    %0 = vector.load %arg2[%c0, %c0_0] : memref<8x128xf32, #tpu.memory_space<vmem>>, vector<8x128xf32>
    %c0_1 = arith.constant 0 : index
    %c0_2 = arith.constant 0 : index
    %1 = vector.load %arg1[%c0_1, %c0_2] : memref<1x128xf32, #tpu.memory_space<vmem>>, vector<1x128xf32>
    %2 = vector.broadcast %1 : vector<1x128xf32> to vector<8x128xf32>
    %3 = arith.mulf %0, %2 : vector<8x128xf32>
    %c0_3 = arith.constant 0 : index
    %c0_4 = arith.constant 0 : index
    %4 = vector.load %arg3[%c0_3, %c0_4] : memref<8x128xf32, #tpu.memory_space<vmem>>, vector<8x128xf32>
    tpu.vector_store %arg3[%c0_3, %c0_4], %3 {strides = array<i32>} : memref<8x128xf32, #tpu.memory_space<vmem>>, vector<8x128xf32>,
    return
  }
  func.func @transform_0(%arg0: i32) -> (i32, i32) {
    %c0_i32 = arith.constant 0 : i32
    %c0_i32_0 = arith.constant 0 : i32
    %c0_i32_1 = arith.constant 0 : i32
    return %c0_i32, %c0_i32_0 : i32, i32
  }
  func.func @transform_1(%arg0: i32) -> (i32, i32) {
    %c0_i32 = arith.constant 0 : i32
    %c0_i32_0 = arith.constant 0 : i32
    return %arg0, %c0_i32 : i32, i32
  }
  func.func @transform_2(%arg0: i32) -> (i32, i32) {
    %c0_i32 = arith.constant 0 : i32
    %c0_i32_0 = arith.constant 0 : i32
    return %arg0, %c0_i32 : i32, i32
  }
}

</mosaic_0001>

<llo_original>
// kernel: tpu_custom_call.1
$region0: #{tpu_custom_call.1}
  #allocation0 [shape = 'u32[]', space=smem, size = 0x4, offset = 0x4, fixed_abs, tag = 'smem constant byte address 0x4 - core index']
  #allocation1 [shape = 'u32[144,128]{1,0:T(1,128)}', space=vmem, size = 0x12000, scoped, tag = 'internal scratch']
  %s0 = inlined_call_operand.hbm [shape: f32[1,128], index: 0, kind: input, shape index: {}]
  %s1 = inlined_call_operand.hbm [shape: f32[4,128], index: 1, kind: input, shape index: {}]
  %s2 = inlined_call_operand.hbm [shape: f32[4,128], index: 2, kind: output, shape index: {}]
  %s3 = sld [smem:[#allocation0]]
  $region26: #{tpu_custom_call.1} parent=0
    _
  %s5 = ssub.s32 1, %s3
  %s6 = scalar_select 0, %s5, %s3
  $region1: #{tpu_custom_call.1} parent=0
    #allocation2 [shape = 'u8[512]{0}', space=vmem, size = 0x400, scoped, tag = 'input window, operand 0, single buffered']
    #allocation3 [shape = 's32[1]{0}', space=sflag, size = 0x4, scoped, tag = 'scoped memory for tpu_custom_call.1']
    #allocation4 [shape = 's32[1]{0}', space=sflag, size = 0x4, scoped, tag = 'scoped memory for tpu_custom_call.1']
    #allocation5 [shape = 'u8[4096]{0}', space=vmem, size = 0x1000, scoped, tag = 'input window, operand 1, single buffered']
    #allocation6 [shape = 's32[1]{0}', space=sflag, size = 0x4, scoped, tag = 'scoped memory for tpu_custom_call.1']
    #allocation7 [shape = 'u8[4096]{0}', space=vmem, size = 0x1000, scoped, tag = 'output window, operand 0, single buffered']
    %7 = vsyncpa [#allocation3], 0
    %8 = vsyncpa [#allocation6], 0
    %9 = vsyncpa [#allocation4], 0
    // Predicated region
    $region2: #{tpu_custom_call.1} parent=1 // pred_check
      _
    $region3: #{tpu_custom_call.1} parent=1 // pred_check_branch
      %11 = sbr.rel (0) target = $region5
    $region4: #{tpu_custom_call.1} parent=1 // pred_region
      %s13 = ssub.s32 16, 16
      %14 = vsyncadd [#allocation3], %s13
      %s16 = sshll.u32 [#allocation2], 4
      %s17 = int_to_ptr.vmem [resolvable:$true] %s16
      %19 = dma.hbm_to_vmem [thread:$0]  %s0, 16, %s17, [#allocation3]
    $region5: #{tpu_custom_call.1} parent=1 // pred_fallthru
      _
    // Predicated region
    $region6: #{tpu_custom_call.1} parent=1 // pred_check
      _
    $region7: #{tpu_custom_call.1} parent=1 // pred_check_branch
      %21 = sbr.rel (0) target = $region9
    $region8: #{tpu_custom_call.1} parent=1 // pred_region
      %s23 = ssub.s32 128, 64
      %24 = vsyncadd [#allocation6], %s23
      %s25 = sshll.u32 [#allocation5], 4
      %s26 = int_to_ptr.vmem [resolvable:$true] %s25
      %31 = dma.hbm_to_vmem [thread:$0]  %s1, 64, %s26, [#allocation6], 64, 64, 4
    $region9: #{tpu_custom_call.1} parent=1 // pred_fallthru
      _
    // Predicated region
    $region10: #{tpu_custom_call.1} parent=1 // pred_check
      _
    $region11: #{tpu_custom_call.1} parent=1 // pred_check_branch
      %33 = sbr.rel (0) target = $region13
    $region12: #{tpu_custom_call.1} parent=1 // pred_region
      %34 = dma.done [#allocation3], 16
    $region13: #{tpu_custom_call.1} parent=1 // pred_fallthru
      _
    // Predicated region
    $region14: #{tpu_custom_call.1} parent=1 // pred_check
      _
    $region15: #{tpu_custom_call.1} parent=1 // pred_check_branch
      %36 = sbr.rel (0) target = $region17
    $region16: #{tpu_custom_call.1} parent=1 // pred_region
      %37 = dma.done [#allocation6], 128
    $region17: #{tpu_custom_call.1} parent=1 // pred_fallthru
      _
    %v38 = vld [vmem:[#allocation5] sm:$0xff]
    %v39 = vld [vmem:[#allocation2] sm:$0x1]
    %v41 = vlaneseq
    %v42 = vshrl.u32 %v41, 7
    %v43 = vsub.s32 0, %v42
    %v44 = vrot.slane %v39, %v43
    %v46 = vmul.f32 %v38, %v44
    %47 = vst [vmem:[#allocation7] sm:$0xff] %v46
    // Predicated region
    $region18: #{tpu_custom_call.1} parent=1 // pred_check
      _
    $region19: #{tpu_custom_call.1} parent=1 // pred_check_branch
      %49 = sbr.rel (0) target = $region21
    $region20: #{tpu_custom_call.1} parent=1 // pred_region
      %s51 = ssub.s32 128, 64
      %52 = vsyncadd [#allocation4], %s51
      %s53 = sshll.u32 [#allocation7], 4
      %s54 = int_to_ptr.vmem [resolvable:$true] %s53
      %59 = dma.vmem_to_hbm [thread:$0]  %s54, 64, %s2, [#allocation4], 64, 64, 4
    $region21: #{tpu_custom_call.1} parent=1 // pred_fallthru
      _
    // Predicated region
    $region22: #{tpu_custom_call.1} parent=1 // pred_check
      _
    $region23: #{tpu_custom_call.1} parent=1 // pred_check_branch
      %61 = sbr.rel (0) target = $region25
    $region24: #{tpu_custom_call.1} parent=1 // pred_region
      %62 = dma.done [#allocation4], 128
    $region25: #{tpu_custom_call.1} parent=1 // pred_fallthru
      _
    %63 = vsyncpa [#allocation3], 1
    %64 = vsyncpa [#allocation6], 1
    %65 = vsyncpa [#allocation4], 1

</llo_original>
